<compile_context>
chip_gen: v5e
topology: v5e:2x2
jax: 0.10.0
libtpu: 0.0.40
codegen_flags: <defaults>
</compile_context>

<pallas_src>
import jax
import jax.numpy as jnp
import numpy as np
from jax.experimental import pallas as pl
from jax.experimental.pallas import tpu as pltpu


# ----------------------------- shared cell math ---------------------------- #

def _gates_to_state(gates, c, E):
    """PyTorch LSTM cell epilogue. gates: (B, 4E) pre-activations, order i,f,g,o."""
    i = jax.nn.sigmoid(gates[:, 0:E])
    f = jax.nn.sigmoid(gates[:, E:2 * E])
    g = jnp.tanh(gates[:, 2 * E:3 * E])
    o = jax.nn.sigmoid(gates[:, 3 * E:4 * E])
    c_new = f * c + i * g
    h_new = o * jnp.tanh(c_new)
    return h_new, c_new


def _lstm_recurrence(x0_ref, h0_ref, c0_ref, wcat_ref, wcomb_ref, b_ref, hs_ref):
    """Runs all T LSTM steps; h_t is written into hs_ref[:, t, :]. hs_ref: (B,T,E)."""
    B, E = h0_ref.shape
    T = hs_ref.shape[1]

    # Loop-invariant loads / broadcasts hoisted once.
    w_comb = wcomb_ref[...]                              # (E, 4E) = W_ih^T + W_hh^T
    bias = jnp.broadcast_to(b_ref[...], (B, 4 * E))      # pre-broadcast ONCE

    # Step 0: input is decoder_embeds[:, 0, :]; fused [x0 | h0] @ [W_ih^T ; W_hh^T].
    xh0 = jnp.concatenate([x0_ref[...], h0_ref[...]], axis=-1)          # (B, 2E)
    gates0 = jnp.dot(xh0, wcat_ref[...],
                     preferred_element_type=jnp.float32) + bias
    h, c = _gates_to_state(gates0, c0_ref[...], E)
    hs_ref[:, pl.ds(0, 1), :] = h[:, None, :].astype(hs_ref.dtype)

    # Steps t >= 1: the LSTM input is the previous output (h_{t-1}), so
    # x @ W_ih^T + h @ W_hh^T == h @ (W_ih^T + W_hh^T): one matmul per step.
    def body(t, carry):
        h, c = carry
        gates = jnp.dot(h, w_comb, preferred_element_type=jnp.float32) + bias
        h_new, c_new = _gates_to_state(gates, c, E)
        hs_ref[:, pl.ds(t, 1), :] = h_new[:, None, :].astype(hs_ref.dtype)
        return (h_new, c_new)

    # Full unroll for short sequences (scheduler visibility); partial otherwise.
    unroll = True if T <= 32 else 8
    jax.lax.fori_loop(1, T, body, (h, c), unroll=unroll)


# ----------------------------- kernels ------------------------------------- #

def _decoder_attn_kernel(x0_ref, h0_ref, c0_ref, wcat_ref, wcomb_ref, b_ref,
                         enc_ref, enc_t_ref, out_ref, hs_ref):
    """Whole decoder: serial recurrence, then one batched attention pass."""
    # 1) Recurrence only -- attention is hoisted off the serial chain.
    _lstm_recurrence(x0_ref, h0_ref, c0_ref, wcat_ref, wcomb_ref, b_ref, hs_ref)

    # 2) Batched attention over all T steps at once (MXU-friendly M=T matmuls).
    hs = hs_ref[...]                                     # (B, T, E) float32
    enc = enc_ref[...]                                   # (B, S, E)
    enc_t = enc_t_ref[...]                               # (B, E, S), pre-transposed
    scores = jnp.einsum("bte,bes->bts", hs, enc_t,
                        preferred_element_type=jnp.float32)             # (B, T, S)
    scores = scores - jnp.max(scores, axis=-1, keepdims=True)
    ex = jnp.exp(scores)
    denom = jnp.sum(ex, axis=-1, keepdims=True)
    inv = pl.reciprocal(denom, approx=True)              # EUP vrcp (free slot)
    inv = inv * (2.0 - denom * inv)                      # one Newton step -> f32-tight
    probs = ex * inv
    attn = jnp.einsum("bts,bse->bte", probs, enc,
                      preferred_element_type=jnp.float32)               # (B, T, E)

    # 3) Single full-block store (no per-step masked stores, concat done once).
    out_ref[...] = jnp.concatenate([hs, attn], axis=-1).astype(out_ref.dtype)


def _decoder_plain_kernel(x0_ref, h0_ref, c0_ref, wcat_ref, wcomb_ref, b_ref,
                          out_ref):
    # out_ref is the VMEM output block itself; one HBM writeback at kernel end.
    _lstm_recurrence(x0_ref, h0_ref, c0_ref, wcat_ref, wcomb_ref, b_ref, out_ref)


# ----------------------------- wrapper ------------------------------------- #

def _nbytes(arrays):
    return sum(int(np.prod(a.shape)) * jnp.dtype(a.dtype).itemsize for a in arrays)


def _vmem_limit_bytes(in_bytes, out_bytes, scratch_bytes=0):
    # Generous headroom; capped so it also fits v7x's 64 MiB physical VMEM.
    need = 4 * (in_bytes + out_bytes + scratch_bytes) + (1 << 20)
    return int(min(max(need, 16 << 20), 64 << 20))


def lstm_decoder_forward(decoder_embeds, hidden_and_cell, params,
                         encoder_output=None, use_attention=True):
    B, T, E = decoder_embeds.shape
    h0, c0 = hidden_and_cell                       # (1, B, E) each (PyTorch layout)
    h0 = h0.reshape(B, E).astype(jnp.float32)
    c0 = c0.reshape(B, E).astype(jnp.float32)
    x0 = decoder_embeds[:, 0, :].astype(jnp.float32)

    wih_t = params["w_ih"].T.astype(jnp.float32)               # (E, 4E)
    whh_t = params["w_hh"].T.astype(jnp.float32)               # (E, 4E)
    w_cat = jnp.concatenate([wih_t, whh_t], axis=0)            # (2E, 4E) -- step 0
    w_comb = wih_t + whh_t                                     # (E, 4E)  -- steps t>0
    bias = (params["b_ih"] + params["b_hh"]).reshape(1, 4 * E).astype(jnp.float32)

    gate_flops = 2 * B * (2 * E) * (4 * E) + 2 * B * E * (4 * E) * max(T - 1, 0)
    gate_trans = 5 * B * E * T                                  # 3 sigmoid + 2 tanh / step

    if use_attention:
        enc = encoder_output.astype(jnp.float32)                # (B, S, E)
        S = enc.shape[1]
        # Pre-transpose the encoder once in the wrapper (mirrors the PyTorch
        # torch.transpose); keeps XLU transposes out of the kernel.
        enc_t = jnp.swapaxes(enc, 1, 2)                         # (B, E, S)
        inputs = (x0, h0, c0, w_cat, w_comb, bias, enc, enc_t)
        out_bytes = B * T * 2 * E * 4
        scratch_bytes = B * T * E * 4
        cost = pl.CostEstimate(
            flops=int(gate_flops + 4 * B * T * S * E),
            transcendentals=int(gate_trans + B * T * S),
            bytes_accessed=int(_nbytes(inputs) + out_bytes))
        return pl.pallas_call(
            _decoder_attn_kernel,
            out_shape=jax.ShapeDtypeStruct((B, T, 2 * E), jnp.float32),
            scratch_shapes=[pltpu.VMEM((B, T, E), jnp.float32)],
            compiler_params=pltpu.CompilerParams(
                vmem_limit_bytes=_vmem_limit_bytes(_nbytes(inputs), out_bytes,
                                                   scratch_bytes)),
            cost_estimate=cost,
        )(*inputs)
    else:
        inputs = (x0, h0, c0, w_cat, w_comb, bias)
        out_bytes = B * T * E * 4
        cost = pl.CostEstimate(
            flops=int(gate_flops),
            transcendentals=int(gate_trans),
            bytes_accessed=int(_nbytes(inputs) + out_bytes))
        return pl.pallas_call(
            _decoder_plain_kernel,
            out_shape=jax.ShapeDtypeStruct((B, T, E), jnp.float32),
            compiler_params=pltpu.CompilerParams(
                vmem_limit_bytes=_vmem_limit_bytes(_nbytes(inputs), out_bytes)),
            cost_estimate=cost,
        )(*inputs)


# ----------------------------- reference ----------------------------------- #

def lstm_decoder_reference(decoder_embeds, hidden_and_cell, params,
                           encoder_output=None, use_attention=True):
    B, T, E = decoder_embeds.shape
    h = hidden_and_cell[0].reshape(B, E)
    c = hidden_and_cell[1].reshape(B, E)
    wih_t = params["w_ih"].T
    whh_t = params["w_hh"].T
    b = (params["b_ih"] + params["b_hh"])[None, :]
    x = decoder_embeds[:, 0, :]
    outs, attns = [], []
    for _ in range(T):
        gates = x @ wih_t + h @ whh_t + b
        h, c = _gates_to_state(gates, c, E)
        outs.append(h)
        if use_attention:
            scores = jnp.einsum("be,bse->bs", h, encoder_output)
            probs = jax.nn.softmax(scores, axis=-1)
            attns.append(jnp.einsum("bs,bse->be", probs, encoder_output))
        x = h
    lstm_out = jnp.stack(outs, axis=1)
    if use_attention:
        return jnp.concatenate([lstm_out, jnp.stack(attns, axis=1)], axis=-1)
    return lstm_out


# ----------------------------- main ----------------------------------------- #

if __name__ == "__main__":
    # Note: the PyTorch module's final torch.cat requires S == T when
    # use_attention=True, so the demo uses S == T.
    B, T, S, E = 2, 8, 8, 32        # batch, decoder steps, encoder steps, embedding_dim

    key = jax.random.PRNGKey(0)
    keys = jax.random.split(key, 8)
    k = 1.0 / np.sqrt(E)            # PyTorch LSTM default init scale

    decoder_embeds = jax.random.normal(keys[0], (B, T, E), dtype=jnp.float32)
    encoder_output = jax.random.normal(keys[1], (B, S, E), dtype=jnp.float32)
    h0 = jax.random.normal(keys[2], (1, B, E), dtype=jnp.float32)
    c0 = jax.random.normal(keys[3], (1, B, E), dtype=jnp.float32)

    params = {
        "w_ih": jax.random.uniform(keys[4], (4 * E, E), jnp.float32, -k, k),
        "w_hh": jax.random.uniform(keys[5], (4 * E, E), jnp.float32, -k, k),
        "b_ih": jax.random.uniform(keys[6], (4 * E,), jnp.float32, -k, k),
        "b_hh": jax.random.uniform(keys[7], (4 * E,), jnp.float32, -k, k),
    }

    # use_attention = True path (the interesting one)
    out_attn = lstm_decoder_forward(decoder_embeds, (h0, c0), params,
                                    encoder_output, use_attention=True)
    out_attn = jax.block_until_ready(out_attn)
    ref_attn = lstm_decoder_reference(decoder_embeds, (h0, c0), params,
                                      encoder_output, use_attention=True)
    assert out_attn.shape == (B, T, 2 * E)
    np.testing.assert_allclose(np.asarray(out_attn), np.asarray(ref_attn),
                               rtol=1e-4, atol=1e-4)

    # use_attention = False path
    out_plain = lstm_decoder_forward(decoder_embeds, (h0, c0), params,
                                     use_attention=False)
    out_plain = jax.block_until_ready(out_plain)
    ref_plain = lstm_decoder_reference(decoder_embeds, (h0, c0), params,
                                       use_attention=False)
    assert out_plain.shape == (B, T, E)
    np.testing.assert_allclose(np.asarray(out_plain), np.asarray(ref_plain),
                               rtol=1e-4, atol=1e-4)

    print("KERNEL_OK")
</pallas_src>

<mosaic_0001>
module attributes {stable_mosaic.version = 11 : i64} {
  func.func @_decoder_attn_kernel(%arg0: memref<2x32xf32, #tpu.memory_space<vmem>>, %arg1: memref<2x32xf32, #tpu.memory_space<vmem>>, %arg2: memref<2x32xf32, #tpu.memory_space<vmem>>, %arg3: memref<64x128xf32, #tpu.memory_space<vmem>>, %arg4: memref<32x128xf32, #tpu.memory_space<vmem>>, %arg5: memref<1x128xf32, #tpu.memory_space<vmem>>, %arg6: memref<2x8x32xf32, #tpu.memory_space<vmem>>, %arg7: memref<2x32x8xf32, #tpu.memory_space<vmem>>, %arg8: memref<2x8x64xf32, #tpu.memory_space<vmem>>, %arg9: memref<2x8x32xf32, #tpu.memory_space<vmem>>) attributes {dimension_semantics = [], scalar_prefetch = 0 : i64, scratch_operands = 1 : i64, tpu.core_type = #tpu.core_type<tc>} {
    %c0 = arith.constant 0 : index
    %c0_0 = arith.constant 0 : index
    %0 = vector.load %arg4[%c0, %c0_0] : memref<32x128xf32, #tpu.memory_space<vmem>>, vector<32x128xf32>
    %c0_1 = arith.constant 0 : index
    %c0_2 = arith.constant 0 : index
    %1 = vector.load %arg5[%c0_1, %c0_2] : memref<1x128xf32, #tpu.memory_space<vmem>>, vector<1x128xf32>
    %2 = vector.shape_cast %1 : vector<1x128xf32> to vector<1x128xf32>
    %3 = vector.broadcast %2 : vector<1x128xf32> to vector<2x128xf32>
    %c0_3 = arith.constant 0 : index
    %c0_4 = arith.constant 0 : index
    %4 = vector.load %arg0[%c0_3, %c0_4] : memref<2x32xf32, #tpu.memory_space<vmem>>, vector<2x32xf32>
    %c0_5 = arith.constant 0 : index
    %c0_6 = arith.constant 0 : index
    %5 = vector.load %arg1[%c0_5, %c0_6] : memref<2x32xf32, #tpu.memory_space<vmem>>, vector<2x32xf32>
    %6 = tpu.concatenate %4, %5 in 1 : vector<2x32xf32>, vector<2x32xf32> -> vector<2x64xf32>
    %c0_7 = arith.constant 0 : index
    %c0_8 = arith.constant 0 : index
    %7 = vector.load %arg3[%c0_7, %c0_8] : memref<64x128xf32, #tpu.memory_space<vmem>>, vector<64x128xf32>
    %cst = arith.constant dense<0.000000e+00> : vector<2x128xf32>
    %8 = tpu.matmul %6, %7, %cst {dimension_numbers = #tpu.dot_dimension_numbers<[1], [0], [0], [1], [0, 0, 1, 1], [], []>} : vector<2x64xf32>, vector<64x128xf32>, vector<2x128xf32> -> vector<2x128xf32>
    %9 = arith.addf %8, %3 : vector<2x128xf32>
    %c0_9 = arith.constant 0 : index
    %c0_10 = arith.constant 0 : index
    %10 = vector.load %arg2[%c0_9, %c0_10] : memref<2x32xf32, #tpu.memory_space<vmem>>, vector<2x32xf32>
    %11 = vector.extract_strided_slice %9 {offsets = [0, 0], sizes = [2, 32], strides = [1, 1]} : vector<2x128xf32> to vector<2x32xf32>
    %12 = arith.negf %11 : vector<2x32xf32>
    %13 = math.exp %12 : vector<2x32xf32>
    %cst_11 = arith.constant 1.000000e+00 : f32
    %14 = vector.broadcast %cst_11 : f32 to vector<2x32xf32>
    %15 = arith.addf %14, %13 : vector<2x32xf32>
    %16 = arith.divf %14, %15 : vector<2x32xf32>
    %17 = vector.extract_strided_slice %9 {offsets = [0, 32], sizes = [2, 32], strides = [1, 1]} : vector<2x128xf32> to vector<2x32xf32>
    %18 = arith.negf %17 : vector<2x32xf32>
    %19 = math.exp %18 : vector<2x32xf32>
    %cst_12 = arith.constant 1.000000e+00 : f32
    %20 = vector.broadcast %cst_12 : f32 to vector<2x32xf32>
    %21 = arith.addf %20, %19 : vector<2x32xf32>
    %22 = arith.divf %20, %21 : vector<2x32xf32>
    %23 = vector.extract_strided_slice %9 {offsets = [0, 64], sizes = [2, 32], strides = [1, 1]} : vector<2x128xf32> to vector<2x32xf32>
    %24 = math.tanh %23 : vector<2x32xf32>
    %25 = vector.extract_strided_slice %9 {offsets = [0, 96], sizes = [2, 32], strides = [1, 1]} : vector<2x128xf32> to vector<2x32xf32>
    %26 = arith.negf %25 : vector<2x32xf32>
    %27 = math.exp %26 : vector<2x32xf32>
    %cst_13 = arith.constant 1.000000e+00 : f32
    %28 = vector.broadcast %cst_13 : f32 to vector<2x32xf32>
    %29 = arith.addf %28, %27 : vector<2x32xf32>
    %30 = arith.divf %28, %29 : vector<2x32xf32>
    %31 = arith.mulf %22, %10 : vector<2x32xf32>
    %32 = arith.mulf %16, %24 : vector<2x32xf32>
    %33 = arith.addf %31, %32 : vector<2x32xf32>
    %34 = math.tanh %33 : vector<2x32xf32>
    %35 = arith.mulf %30, %34 : vector<2x32xf32>
    %36 = vector.shape_cast %35 : vector<2x32xf32> to vector<2x1x32xf32>
    %c0_14 = arith.constant 0 : index
    %c0_15 = arith.constant 0 : index
    %c0_16 = arith.constant 0 : index
    %37 = vector.load %arg9[%c0_14, %c0_15, %c0_16] : memref<2x8x32xf32, #tpu.memory_space<vmem>>, vector<2x1x32xf32>
    tpu.vector_store %arg9[%c0_14, %c0_15, %c0_16], %36 {strides = array<i32>} : memref<2x8x32xf32, #tpu.memory_space<vmem>>, vector<2x1x32xf32>,
    %c1_i32 = arith.constant 1 : i32
    %cst_17 = arith.constant dense<0.000000e+00> : vector<2x128xf32>
    %38 = tpu.matmul %35, %0, %cst_17 {dimension_numbers = #tpu.dot_dimension_numbers<[1], [0], [0], [1], [0, 0, 1, 1], [], []>} : vector<2x32xf32>, vector<32x128xf32>, vector<2x128xf32> -> vector<2x128xf32>
    %39 = arith.addf %38, %3 : vector<2x128xf32>
    %40 = vector.extract_strided_slice %39 {offsets = [0, 0], sizes = [2, 32], strides = [1, 1]} : vector<2x128xf32> to vector<2x32xf32>
    %41 = arith.negf %40 : vector<2x32xf32>
    %42 = math.exp %41 : vector<2x32xf32>
    %cst_18 = arith.constant 1.000000e+00 : f32
    %43 = vector.broadcast %cst_18 : f32 to vector<2x32xf32>
    %44 = arith.addf %43, %42 : vector<2x32xf32>
    %45 = arith.divf %43, %44 : vector<2x32xf32>
    %46 = vector.extract_strided_slice %39 {offsets = [0, 32], sizes = [2, 32], strides = [1, 1]} : vector<2x128xf32> to vector<2x32xf32>
    %47 = arith.negf %46 : vector<2x32xf32>
    %48 = math.exp %47 : vector<2x32xf32>
    %cst_19 = arith.constant 1.000000e+00 : f32
    %49 = vector.broadcast %cst_19 : f32 to vector<2x32xf32>
    %50 = arith.addf %49, %48 : vector<2x32xf32>
    %51 = arith.divf %49, %50 : vector<2x32xf32>
    %52 = vector.extract_strided_slice %39 {offsets = [0, 64], sizes = [2, 32], strides = [1, 1]} : vector<2x128xf32> to vector<2x32xf32>
    %53 = math.tanh %52 : vector<2x32xf32>
    %54 = vector.extract_strided_slice %39 {offsets = [0, 96], sizes = [2, 32], strides = [1, 1]} : vector<2x128xf32> to vector<2x32xf32>
    %55 = arith.negf %54 : vector<2x32xf32>
    %56 = math.exp %55 : vector<2x32xf32>
    %cst_20 = arith.constant 1.000000e+00 : f32
    %57 = vector.broadcast %cst_20 : f32 to vector<2x32xf32>
    %58 = arith.addf %57, %56 : vector<2x32xf32>
    %59 = arith.divf %57, %58 : vector<2x32xf32>
    %60 = arith.mulf %51, %33 : vector<2x32xf32>
    %61 = arith.mulf %45, %53 : vector<2x32xf32>
    %62 = arith.addf %60, %61 : vector<2x32xf32>
    %63 = math.tanh %62 : vector<2x32xf32>
    %64 = arith.mulf %59, %63 : vector<2x32xf32>
    %65 = vector.shape_cast %64 : vector<2x32xf32> to vector<2x1x32xf32>
    %c0_21 = arith.constant 0 : index
    %66 = arith.index_cast %c1_i32 : i32 to index
    %c0_22 = arith.constant 0 : index
    %67 = vector.load %arg9[%c0_21, %66, %c0_22] : memref<2x8x32xf32, #tpu.memory_space<vmem>>, vector<2x1x32xf32>
    tpu.vector_store %arg9[%c0_21, %66, %c0_22], %65 {strides = array<i32>} : memref<2x8x32xf32, #tpu.memory_space<vmem>>, vector<2x1x32xf32>,
    %c2_i32 = arith.constant 2 : i32
    %cst_23 = arith.constant dense<0.000000e+00> : vector<2x128xf32>
    %68 = tpu.matmul %64, %0, %cst_23 {dimension_numbers = #tpu.dot_dimension_numbers<[1], [0], [0], [1], [0, 0, 1, 1], [], []>} : vector<2x32xf32>, vector<32x128xf32>, vector<2x128xf32> -> vector<2x128xf32>
    %69 = arith.addf %68, %3 : vector<2x128xf32>
    %70 = vector.extract_strided_slice %69 {offsets = [0, 0], sizes = [2, 32], strides = [1, 1]} : vector<2x128xf32> to vector<2x32xf32>
    %71 = arith.negf %70 : vector<2x32xf32>
    %72 = math.exp %71 : vector<2x32xf32>
    %cst_24 = arith.constant 1.000000e+00 : f32
    %73 = vector.broadcast %cst_24 : f32 to vector<2x32xf32>
    %74 = arith.addf %73, %72 : vector<2x32xf32>
    %75 = arith.divf %73, %74 : vector<2x32xf32>
    %76 = vector.extract_strided_slice %69 {offsets = [0, 32], sizes = [2, 32], strides = [1, 1]} : vector<2x128xf32> to vector<2x32xf32>
    %77 = arith.negf %76 : vector<2x32xf32>
    %78 = math.exp %77 : vector<2x32xf32>
    %cst_25 = arith.constant 1.000000e+00 : f32
    %79 = vector.broadcast %cst_25 : f32 to vector<2x32xf32>
    %80 = arith.addf %79, %78 : vector<2x32xf32>
    %81 = arith.divf %79, %80 : vector<2x32xf32>
    %82 = vector.extract_strided_slice %69 {offsets = [0, 64], sizes = [2, 32], strides = [1, 1]} : vector<2x128xf32> to vector<2x32xf32>
    %83 = math.tanh %82 : vector<2x32xf32>
    %84 = vector.extract_strided_slice %69 {offsets = [0, 96], sizes = [2, 32], strides = [1, 1]} : vector<2x128xf32> to vector<2x32xf32>
    %85 = arith.negf %84 : vector<2x32xf32>
    %86 = math.exp %85 : vector<2x32xf32>
    %cst_26 = arith.constant 1.000000e+00 : f32
    %87 = vector.broadcast %cst_26 : f32 to vector<2x32xf32>
    %88 = arith.addf %87, %86 : vector<2x32xf32>
    %89 = arith.divf %87, %88 : vector<2x32xf32>
    %90 = arith.mulf %81, %62 : vector<2x32xf32>
    %91 = arith.mulf %75, %83 : vector<2x32xf32>
    %92 = arith.addf %90, %91 : vector<2x32xf32>
    %93 = math.tanh %92 : vector<2x32xf32>
    %94 = arith.mulf %89, %93 : vector<2x32xf32>
    %95 = vector.shape_cast %94 : vector<2x32xf32> to vector<2x1x32xf32>
    %c0_27 = arith.constant 0 : index
    %96 = arith.index_cast %c2_i32 : i32 to index
    %c0_28 = arith.constant 0 : index
    %97 = vector.load %arg9[%c0_27, %96, %c0_28] : memref<2x8x32xf32, #tpu.memory_space<vmem>>, vector<2x1x32xf32>
    tpu.vector_store %arg9[%c0_27, %96, %c0_28], %95 {strides = array<i32>} : memref<2x8x32xf32, #tpu.memory_space<vmem>>, vector<2x1x32xf32>,
    %c3_i32 = arith.constant 3 : i32
    %cst_29 = arith.constant dense<0.000000e+00> : vector<2x128xf32>
    %98 = tpu.matmul %94, %0, %cst_29 {dimension_numbers = #tpu.dot_dimension_numbers<[1], [0], [0], [1], [0, 0, 1, 1], [], []>} : vector<2x32xf32>, vector<32x128xf32>, vector<2x128xf32> -> vector<2x128xf32>
    %99 = arith.addf %98, %3 : vector<2x128xf32>
    %100 = vector.extract_strided_slice %99 {offsets = [0, 0], sizes = [2, 32], strides = [1, 1]} : vector<2x128xf32> to vector<2x32xf32>
    %101 = arith.negf %100 : vector<2x32xf32>
    %102 = math.exp %101 : vector<2x32xf32>
    %cst_30 = arith.constant 1.000000e+00 : f32
    %103 = vector.broadcast %cst_30 : f32 to vector<2x32xf32>
    %104 = arith.addf %103, %102 : vector<2x32xf32>
    %105 = arith.divf %103, %104 : vector<2x32xf32>
    %106 = vector.extract_strided_slice %99 {offsets = [0, 32], sizes = [2, 32], strides = [1, 1]} : vector<2x128xf32> to vector<2x32xf32>
    %107 = arith.negf %106 : vector<2x32xf32>
    %108 = math.exp %107 : vector<2x32xf32>
    %cst_31 = arith.constant 1.000000e+00 : f32
    %109 = vector.broadcast %cst_31 : f32 to vector<2x32xf32>
    %110 = arith.addf %109, %108 : vector<2x32xf32>
    %111 = arith.divf %109, %110 : vector<2x32xf32>
    %112 = vector.extract_strided_slice %99 {offsets = [0, 64], sizes = [2, 32], strides = [1, 1]} : vector<2x128xf32> to vector<2x32xf32>
    %113 = math.tanh %112 : vector<2x32xf32>
    %114 = vector.extract_strided_slice %99 {offsets = [0, 96], sizes = [2, 32], strides = [1, 1]} : vector<2x128xf32> to vector<2x32xf32>
    %115 = arith.negf %114 : vector<2x32xf32>
    %116 = math.exp %115 : vector<2x32xf32>
    %cst_32 = arith.constant 1.000000e+00 : f32
    %117 = vector.broadcast %cst_32 : f32 to vector<2x32xf32>
    %118 = arith.addf %117, %116 : vector<2x32xf32>
    %119 = arith.divf %117, %118 : vector<2x32xf32>
    %120 = arith.mulf %111, %92 : vector<2x32xf32>
    %121 = arith.mulf %105, %113 : vector<2x32xf32>
    %122 = arith.addf %120, %121 : vector<2x32xf32>
    %123 = math.tanh %122 : vector<2x32xf32>
    %124 = arith.mulf %119, %123 : vector<2x32xf32>
    %125 = vector.shape_cast %124 : vector<2x32xf32> to vector<2x1x32xf32>
    %c0_33 = arith.constant 0 : index
    %126 = arith.index_cast %c3_i32 : i32 to index
    %c0_34 = arith.constant 0 : index
    %127 = vector.load %arg9[%c0_33, %126, %c0_34] : memref<2x8x32xf32, #tpu.memory_space<vmem>>, vector<2x1x32xf32>
    tpu.vector_store %arg9[%c0_33, %126, %c0_34], %125 {strides = array<i32>} : memref<2x8x32xf32, #tpu.memory_space<vmem>>, vector<2x1x32xf32>,
    %c4_i32 = arith.constant 4 : i32
    %cst_35 = arith.constant dense<0.000000e+00> : vector<2x128xf32>
    %128 = tpu.matmul %124, %0, %cst_35 {dimension_numbers = #tpu.dot_dimension_numbers<[1], [0], [0], [1], [0, 0, 1, 1], [], []>} : vector<2x32xf32>, vector<32x128xf32>, vector<2x128xf32> -> vector<2x128xf32>
    %129 = arith.addf %128, %3 : vector<2x128xf32>
    %130 = vector.extract_strided_slice %129 {offsets = [0, 0], sizes = [2, 32], strides = [1, 1]} : vector<2x128xf32> to vector<2x32xf32>
    %131 = arith.negf %130 : vector<2x32xf32>
    %132 = math.exp %131 : vector<2x32xf32>
    %cst_36 = arith.constant 1.000000e+00 : f32
    %133 = vector.broadcast %cst_36 : f32 to vector<2x32xf32>
    %134 = arith.addf %133, %132 : vector<2x32xf32>
    %135 = arith.divf %133, %134 : vector<2x32xf32>
    %136 = vector.extract_strided_slice %129 {offsets = [0, 32], sizes = [2, 32], strides = [1, 1]} : vector<2x128xf32> to vector<2x32xf32>
    %137 = arith.negf %136 : vector<2x32xf32>
    %138 = math.exp %137 : vector<2x32xf32>
    %cst_37 = arith.constant 1.000000e+00 : f32
    %139 = vector.broadcast %cst_37 : f32 to vector<2x32xf32>
    %140 = arith.addf %139, %138 : vector<2x32xf32>
    %141 = arith.divf %139, %140 : vector<2x32xf32>
    %142 = vector.extract_strided_slice %129 {offsets = [0, 64], sizes = [2, 32], strides = [1, 1]} : vector<2x128xf32> to vector<2x32xf32>
    %143 = math.tanh %142 : vector<2x32xf32>
    %144 = vector.extract_strided_slice %129 {offsets = [0, 96], sizes = [2, 32], strides = [1, 1]} : vector<2x128xf32> to vector<2x32xf32>
    %145 = arith.negf %144 : vector<2x32xf32>
    %146 = math.exp %145 : vector<2x32xf32>
    %cst_38 = arith.constant 1.000000e+00 : f32
    %147 = vector.broadcast %cst_38 : f32 to vector<2x32xf32>
    %148 = arith.addf %147, %146 : vector<2x32xf32>
    %149 = arith.divf %147, %148 : vector<2x32xf32>
    %150 = arith.mulf %141, %122 : vector<2x32xf32>
    %151 = arith.mulf %135, %143 : vector<2x32xf32>
    %152 = arith.addf %150, %151 : vector<2x32xf32>
    %153 = math.tanh %152 : vector<2x32xf32>
    %154 = arith.mulf %149, %153 : vector<2x32xf32>
    %155 = vector.shape_cast %154 : vector<2x32xf32> to vector<2x1x32xf32>
    %c0_39 = arith.constant 0 : index
    %156 = arith.index_cast %c4_i32 : i32 to index
    %c0_40 = arith.constant 0 : index
    %157 = vector.load %arg9[%c0_39, %156, %c0_40] : memref<2x8x32xf32, #tpu.memory_space<vmem>>, vector<2x1x32xf32>
    tpu.vector_store %arg9[%c0_39, %156, %c0_40], %155 {strides = array<i32>} : memref<2x8x32xf32, #tpu.memory_space<vmem>>, vector<2x1x32xf32>,
    %c5_i32 = arith.constant 5 : i32
    %cst_41 = arith.constant dense<0.000000e+00> : vector<2x128xf32>
    %158 = tpu.matmul %154, %0, %cst_41 {dimension_numbers = #tpu.dot_dimension_numbers<[1], [0], [0], [1], [0, 0, 1, 1], [], []>} : vector<2x32xf32>, vector<32x128xf32>, vector<2x128xf32> -> vector<2x128xf32>
    %159 = arith.addf %158, %3 : vector<2x128xf32>
    %160 = vector.extract_strided_slice %159 {offsets = [0, 0], sizes = [2, 32], strides = [1, 1]} : vector<2x128xf32> to vector<2x32xf32>
    %161 = arith.negf %160 : vector<2x32xf32>
    %162 = math.exp %161 : vector<2x32xf32>
    %cst_42 = arith.constant 1.000000e+00 : f32
    %163 = vector.broadcast %cst_42 : f32 to vector<2x32xf32>
    %164 = arith.addf %163, %162 : vector<2x32xf32>
    %165 = arith.divf %163, %164 : vector<2x32xf32>
    %166 = vector.extract_strided_slice %159 {offsets = [0, 32], sizes = [2, 32], strides = [1, 1]} : vector<2x128xf32> to vector<2x32xf32>
    %167 = arith.negf %166 : vector<2x32xf32>
    %168 = math.exp %167 : vector<2x32xf32>
    %cst_43 = arith.constant 1.000000e+00 : f32
    %169 = vector.broadcast %cst_43 : f32 to vector<2x32xf32>
    %170 = arith.addf %169, %168 : vector<2x32xf32>
    %171 = arith.divf %169, %170 : vector<2x32xf32>
    %172 = vector.extract_strided_slice %159 {offsets = [0, 64], sizes = [2, 32], strides = [1, 1]} : vector<2x128xf32> to vector<2x32xf32>
    %173 = math.tanh %172 : vector<2x32xf32>
    %174 = vector.extract_strided_slice %159 {offsets = [0, 96], sizes = [2, 32], strides = [1, 1]} : vector<2x128xf32> to vector<2x32xf32>
    %175 = arith.negf %174 : vector<2x32xf32>
    %176 = math.exp %175 : vector<2x32xf32>
    %cst_44 = arith.constant 1.000000e+00 : f32
    %177 = vector.broadcast %cst_44 : f32 to vector<2x32xf32>
    %178 = arith.addf %177, %176 : vector<2x32xf32>
    %179 = arith.divf %177, %178 : vector<2x32xf32>
    %180 = arith.mulf %171, %152 : vector<2x32xf32>
    %181 = arith.mulf %165, %173 : vector<2x32xf32>
    %182 = arith.addf %180, %181 : vector<2x32xf32>
    %183 = math.tanh %182 : vector<2x32xf32>
    %184 = arith.mulf %179, %183 : vector<2x32xf32>
    %185 = vector.shape_cast %184 : vector<2x32xf32> to vector<2x1x32xf32>
    %c0_45 = arith.constant 0 : index
    %186 = arith.index_cast %c5_i32 : i32 to index
    %c0_46 = arith.constant 0 : index
    %187 = vector.load %arg9[%c0_45, %186, %c0_46] : memref<2x8x32xf32, #tpu.memory_space<vmem>>, vector<2x1x32xf32>
    tpu.vector_store %arg9[%c0_45, %186, %c0_46], %185 {strides = array<i32>} : memref<2x8x32xf32, #tpu.memory_space<vmem>>, vector<2x1x32xf32>,
    %c6_i32 = arith.constant 6 : i32
    %cst_47 = arith.constant dense<0.000000e+00> : vector<2x128xf32>
    %188 = tpu.matmul %184, %0, %cst_47 {dimension_numbers = #tpu.dot_dimension_numbers<[1], [0], [0], [1], [0, 0, 1, 1], [], []>} : vector<2x32xf32>, vector<32x128xf32>, vector<2x128xf32> -> vector<2x128xf32>
    %189 = arith.addf %188, %3 : vector<2x128xf32>
    %190 = vector.extract_strided_slice %189 {offsets = [0, 0], sizes = [2, 32], strides = [1, 1]} : vector<2x128xf32> to vector<2x32xf32>
    %191 = arith.negf %190 : vector<2x32xf32>
    %192 = math.exp %191 : vector<2x32xf32>
    %cst_48 = arith.constant 1.000000e+00 : f32
    %193 = vector.broadcast %cst_48 : f32 to vector<2x32xf32>
    %194 = arith.addf %193, %192 : vector<2x32xf32>
    %195 = arith.divf %193, %194 : vector<2x32xf32>
    %196 = vector.extract_strided_slice %189 {offsets = [0, 32], sizes = [2, 32], strides = [1, 1]} : vector<2x128xf32> to vector<2x32xf32>
    %197 = arith.negf %196 : vector<2x32xf32>
    %198 = math.exp %197 : vector<2x32xf32>
    %cst_49 = arith.constant 1.000000e+00 : f32
    %199 = vector.broadcast %cst_49 : f32 to vector<2x32xf32>
    %200 = arith.addf %199, %198 : vector<2x32xf32>
    %201 = arith.divf %199, %200 : vector<2x32xf32>
    %202 = vector.extract_strided_slice %189 {offsets = [0, 64], sizes = [2, 32], strides = [1, 1]} : vector<2x128xf32> to vector<2x32xf32>
    %203 = math.tanh %202 : vector<2x32xf32>
    %204 = vector.extract_strided_slice %189 {offsets = [0, 96], sizes = [2, 32], strides = [1, 1]} : vector<2x128xf32> to vector<2x32xf32>
    %205 = arith.negf %204 : vector<2x32xf32>
    %206 = math.exp %205 : vector<2x32xf32>
    %cst_50 = arith.constant 1.000000e+00 : f32
    %207 = vector.broadcast %cst_50 : f32 to vector<2x32xf32>
    %208 = arith.addf %207, %206 : vector<2x32xf32>
    %209 = arith.divf %207, %208 : vector<2x32xf32>
    %210 = arith.mulf %201, %182 : vector<2x32xf32>
    %211 = arith.mulf %195, %203 : vector<2x32xf32>
    %212 = arith.addf %210, %211 : vector<2x32xf32>
    %213 = math.tanh %212 : vector<2x32xf32>
    %214 = arith.mulf %209, %213 : vector<2x32xf32>
    %215 = vector.shape_cast %214 : vector<2x32xf32> to vector<2x1x32xf32>
    %c0_51 = arith.constant 0 : index
    %216 = arith.index_cast %c6_i32 : i32 to index
    %c0_52 = arith.constant 0 : index
    %217 = vector.load %arg9[%c0_51, %216, %c0_52] : memref<2x8x32xf32, #tpu.memory_space<vmem>>, vector<2x1x32xf32>
    tpu.vector_store %arg9[%c0_51, %216, %c0_52], %215 {strides = array<i32>} : memref<2x8x32xf32, #tpu.memory_space<vmem>>, vector<2x1x32xf32>,
    %c7_i32 = arith.constant 7 : i32
    %cst_53 = arith.constant dense<0.000000e+00> : vector<2x128xf32>
    %218 = tpu.matmul %214, %0, %cst_53 {dimension_numbers = #tpu.dot_dimension_numbers<[1], [0], [0], [1], [0, 0, 1, 1], [], []>} : vector<2x32xf32>, vector<32x128xf32>, vector<2x128xf32> -> vector<2x128xf32>
    %219 = arith.addf %218, %3 : vector<2x128xf32>
    %220 = vector.extract_strided_slice %219 {offsets = [0, 0], sizes = [2, 32], strides = [1, 1]} : vector<2x128xf32> to vector<2x32xf32>
    %221 = arith.negf %220 : vector<2x32xf32>
    %222 = math.exp %221 : vector<2x32xf32>
    %cst_54 = arith.constant 1.000000e+00 : f32
    %223 = vector.broadcast %cst_54 : f32 to vector<2x32xf32>
    %224 = arith.addf %223, %222 : vector<2x32xf32>
    %225 = arith.divf %223, %224 : vector<2x32xf32>
    %226 = vector.extract_strided_slice %219 {offsets = [0, 32], sizes = [2, 32], strides = [1, 1]} : vector<2x128xf32> to vector<2x32xf32>
    %227 = arith.negf %226 : vector<2x32xf32>
    %228 = math.exp %227 : vector<2x32xf32>
    %cst_55 = arith.constant 1.000000e+00 : f32
    %229 = vector.broadcast %cst_55 : f32 to vector<2x32xf32>
    %230 = arith.addf %229, %228 : vector<2x32xf32>
    %231 = arith.divf %229, %230 : vector<2x32xf32>
    %232 = vector.extract_strided_slice %219 {offsets = [0, 64], sizes = [2, 32], strides = [1, 1]} : vector<2x128xf32> to vector<2x32xf32>
    %233 = math.tanh %232 : vector<2x32xf32>
    %234 = vector.extract_strided_slice %219 {offsets = [0, 96], sizes = [2, 32], strides = [1, 1]} : vector<2x128xf32> to vector<2x32xf32>
    %235 = arith.negf %234 : vector<2x32xf32>
    %236 = math.exp %235 : vector<2x32xf32>
    %cst_56 = arith.constant 1.000000e+00 : f32
    %237 = vector.broadcast %cst_56 : f32 to vector<2x32xf32>
    %238 = arith.addf %237, %236 : vector<2x32xf32>
    %239 = arith.divf %237, %238 : vector<2x32xf32>
    %240 = arith.mulf %231, %212 : vector<2x32xf32>
    %241 = arith.mulf %225, %233 : vector<2x32xf32>
    %242 = arith.addf %240, %241 : vector<2x32xf32>
    %243 = math.tanh %242 : vector<2x32xf32>
    %244 = arith.mulf %239, %243 : vector<2x32xf32>
    %245 = vector.shape_cast %244 : vector<2x32xf32> to vector<2x1x32xf32>
    %c0_57 = arith.constant 0 : index
    %246 = arith.index_cast %c7_i32 : i32 to index
    %c0_58 = arith.constant 0 : index
    %247 = vector.load %arg9[%c0_57, %246, %c0_58] : memref<2x8x32xf32, #tpu.memory_space<vmem>>, vector<2x1x32xf32>
    tpu.vector_store %arg9[%c0_57, %246, %c0_58], %245 {strides = array<i32>} : memref<2x8x32xf32, #tpu.memory_space<vmem>>, vector<2x1x32xf32>,
    %c7_i32_59 = arith.constant 7 : i32
    %c0_60 = arith.constant 0 : index
    %c0_61 = arith.constant 0 : index
    %c0_62 = arith.constant 0 : index
    %248 = vector.load %arg9[%c0_60, %c0_61, %c0_62] : memref<2x8x32xf32, #tpu.memory_space<vmem>>, vector<2x8x32xf32>
    %c0_63 = arith.constant 0 : index
    %c0_64 = arith.constant 0 : index
    %c0_65 = arith.constant 0 : index
    %249 = vector.load %arg6[%c0_63, %c0_64, %c0_65] : memref<2x8x32xf32, #tpu.memory_space<vmem>>, vector<2x8x32xf32>
    %c0_66 = arith.constant 0 : index
    %c0_67 = arith.constant 0 : index
    %c0_68 = arith.constant 0 : index
    %250 = vector.load %arg7[%c0_66, %c0_67, %c0_68] : memref<2x32x8xf32, #tpu.memory_space<vmem>>, vector<2x32x8xf32>
    "tpu.trace_start"() <{level = 10 : i32, message = "bte,bes->bts"}> : () -> ()
    %cst_69 = arith.constant dense<0.000000e+00> : vector<2x8x8xf32>
    %251 = tpu.matmul %248, %250, %cst_69 {dimension_numbers = #tpu.dot_dimension_numbers<[2], [1], [1], [2], [0, 0, 0, 1, 1, 2], [0], [0]>} : vector<2x8x32xf32>, vector<2x32x8xf32>, vector<2x8x8xf32> -> vector<2x8x8xf32>
    "tpu.trace_stop"() : () -> ()
    %cst_70 = arith.constant dense<0xFF800000> : vector<2x8xf32>
    %252 = vector.multi_reduction <maximumf>, %251, %cst_70 [2] : vector<2x8x8xf32> to vector<2x8xf32>
    %253 = vector.shape_cast %252 : vector<2x8xf32> to vector<2x8x1xf32>
    %254 = vector.broadcast %253 : vector<2x8x1xf32> to vector<2x8x8xf32>
    %255 = arith.subf %251, %254 : vector<2x8x8xf32>
    %256 = math.exp %255 : vector<2x8x8xf32>
    %cst_71 = arith.constant dense<0.000000e+00> : vector<2x8xf32>
    %257 = vector.multi_reduction <add>, %256, %cst_71 [2] : vector<2x8x8xf32> to vector<2x8xf32>
    %258 = vector.shape_cast %257 : vector<2x8xf32> to vector<2x8x1xf32>
    %259 = tpu.reciprocal %258 {approx = true} : vector<2x8x1xf32> -> vector<2x8x1xf32>
    %260 = arith.mulf %258, %259 : vector<2x8x1xf32>
    %cst_72 = arith.constant 2.000000e+00 : f32
    %261 = vector.broadcast %cst_72 : f32 to vector<2x8x1xf32>
    %262 = arith.subf %261, %260 : vector<2x8x1xf32>
    %263 = arith.mulf %259, %262 : vector<2x8x1xf32>
    %264 = vector.broadcast %263 : vector<2x8x1xf32> to vector<2x8x8xf32>
    %265 = arith.mulf %256, %264 : vector<2x8x8xf32>
    "tpu.trace_start"() <{level = 10 : i32, message = "bts,bse->bte"}> : () -> ()
    %cst_73 = arith.constant dense<0.000000e+00> : vector<2x8x32xf32>
    %266 = tpu.matmul %265, %249, %cst_73 {dimension_numbers = #tpu.dot_dimension_numbers<[2], [1], [1], [2], [0, 0, 0, 1, 1, 2], [0], [0]>} : vector<2x8x8xf32>, vector<2x8x32xf32>, vector<2x8x32xf32> -> vector<2x8x32xf32>
    "tpu.trace_stop"() : () -> ()
    %267 = tpu.concatenate %248, %266 in 2 : vector<2x8x32xf32>, vector<2x8x32xf32> -> vector<2x8x64xf32>
    %c0_74 = arith.constant 0 : index
    %c0_75 = arith.constant 0 : index
    %c0_76 = arith.constant 0 : index
    %268 = vector.load %arg8[%c0_74, %c0_75, %c0_76] : memref<2x8x64xf32, #tpu.memory_space<vmem>>, vector<2x8x64xf32>
    tpu.vector_store %arg8[%c0_74, %c0_75, %c0_76], %267 {strides = array<i32>} : memref<2x8x64xf32, #tpu.memory_space<vmem>>, vector<2x8x64xf32>,
    return
  }
}

</mosaic_0001>

<llo_original>
// kernel: tpu_custom_call.1
$region0: #{tpu_custom_call.1}
  #allocation0 [shape = 'u32[]', space=smem, size = 0x4, offset = 0x4, fixed_abs, tag = 'smem constant byte address 0x4 - core index']
  #allocation1 [shape = 'u32[72,128]{1,0:T(1,128)}', space=vmem, size = 0x9000, scoped, tag = 'internal scratch']
  #allocation2 [shape = 'f32[2,8,32]{2,1,0:T(8,128)}', space=vmem, size = 0x2000, scoped, tag = 'scratch operand']
  %s0 = inlined_call_operand.vmem [shape: f32[2,32], index: 0, kind: input, shape index: {}]
  %s1 = inlined_call_operand.hbm [shape: f32[2,32], index: 1, kind: input, shape index: {}]
  %s2 = inlined_call_operand.hbm [shape: f32[2,32], index: 2, kind: input, shape index: {}]
  %s3 = inlined_call_operand.vmem [shape: f32[64,128], index: 3, kind: input, shape index: {}]
  %s4 = inlined_call_operand.hbm [shape: f32[32,128], index: 4, kind: input, shape index: {}]
  %s5 = inlined_call_operand.vmem [shape: f32[1,128], index: 5, kind: input, shape index: {}]
  %s6 = inlined_call_operand.vmem [shape: f32[2,8,32], index: 6, kind: input, shape index: {}]
  %s7 = inlined_call_operand.vmem [shape: f32[2,32,8], index: 7, kind: input, shape index: {}]
  %s8 = inlined_call_operand.hbm [shape: f32[2,8,64], index: 8, kind: output, shape index: {}]
  %s9 = sld [smem:[#allocation0]]
  $region54: #{tpu_custom_call.1} parent=0
    _
  %s11 = ssub.s32 1, %s9
  %s12 = scalar_select 0, %s11, %s9
  $region1: #{tpu_custom_call.1} parent=0
    #allocation3 [shape = 'u8[1024]{0}', space=vmem, size = 0x400, scoped, tag = 'input window, operand 1, single buffered']
    #allocation4 [shape = 's32[1]{0}', space=sflag, size = 0x4, scoped, tag = 'scoped memory for tpu_custom_call.1']
    #allocation5 [shape = 's32[1]{0}', space=sflag, size = 0x4, scoped, tag = 'scoped memory for tpu_custom_call.1']
    #allocation6 [shape = 'u8[1024]{0}', space=vmem, size = 0x400, scoped, tag = 'input window, operand 2, single buffered']
    #allocation7 [shape = 's32[1]{0}', space=sflag, size = 0x4, scoped, tag = 'scoped memory for tpu_custom_call.1']
    #allocation8 [shape = 'u8[16384]{0}', space=vmem, size = 0x4000, scoped, tag = 'input window, operand 4, single buffered']
    #allocation9 [shape = 'u8[8192]{0}', space=vmem, size = 0x2000, scoped, tag = 'output window, operand 0, single buffered']
    %13 = vsyncpa [#allocation4], 0
    %14 = vsyncpa [#allocation7], 0
    %15 = vsyncpa [#allocation5], 0
    // Predicated region
    $region2: #{tpu_custom_call.1} parent=1 // pred_check
      _
    $region3: #{tpu_custom_call.1} parent=1 // pred_check_branch
      %17 = sbr.rel (0) target = $region5
    $region4: #{tpu_custom_call.1} parent=1 // pred_region
      _
    $region5: #{tpu_custom_call.1} parent=1 // pred_fallthru
      _
    // Predicated region
    $region6: #{tpu_custom_call.1} parent=1 // pred_check
      _
    $region7: #{tpu_custom_call.1} parent=1 // pred_check_branch
      %19 = sbr.rel (0) target = $region9
    $region8: #{tpu_custom_call.1} parent=1 // pred_region
      %21 = vsyncadd [#allocation4], 0
      %s23 = sshll.u32 %s1, 4
      %s24 = int_to_ptr.hbm [resolvable:$true] %s23
      %s25 = sshll.u32 [#allocation3], 4
      %s26 = int_to_ptr.vmem [resolvable:$true] %s25
      %28 = dma.hbm_to_vmem [thread:$0]  %s24, 32, %s26, [#allocation4]
    $region9: #{tpu_custom_call.1} parent=1 // pred_fallthru
      _
    // Predicated region
    $region10: #{tpu_custom_call.1} parent=1 // pred_check
      _
    $region11: #{tpu_custom_call.1} parent=1 // pred_check_branch
      %30 = sbr.rel (0) target = $region13
    $region12: #{tpu_custom_call.1} parent=1 // pred_region
      %32 = vsyncadd [#allocation7], 0
      %s34 = sshll.u32 %s2, 4
      %s35 = int_to_ptr.hbm [resolvable:$true] %s34
      %s36 = sshll.u32 [#allocation6], 4
      %s37 = int_to_ptr.vmem [resolvable:$true] %s36
      %39 = dma.hbm_to_vmem [thread:$0]  %s35, 32, %s37, [#allocation7]
    $region13: #{tpu_custom_call.1} parent=1 // pred_fallthru
      _
    // Predicated region
    $region14: #{tpu_custom_call.1} parent=1 // pred_check
      _
    $region15: #{tpu_custom_call.1} parent=1 // pred_check_branch
      %41 = sbr.rel (0) target = $region17
    $region16: #{tpu_custom_call.1} parent=1 // pred_region
      _
    $region17: #{tpu_custom_call.1} parent=1 // pred_fallthru
      _
    // Predicated region
    $region18: #{tpu_custom_call.1} parent=1 // pred_check
      _
    $region19: #{tpu_custom_call.1} parent=1 // pred_check_branch
      %43 = sbr.rel (0) target = $region21
    $region20: #{tpu_custom_call.1} parent=1 // pred_region
      %45 = vsyncadd [#allocation7], 0
      %s46 = sshll.u32 %s4, 4
      %s47 = int_to_ptr.hbm [resolvable:$true] %s46
      %s48 = sshll.u32 [#allocation8], 4
      %s49 = int_to_ptr.vmem [resolvable:$true] %s48
      %54 = dma.hbm_to_vmem [thread:$0]  %s47, 512, %s49, [#allocation7], 128, 128, 8
    $region21: #{tpu_custom_call.1} parent=1 // pred_fallthru
      _
    // Predicated region
    $region22: #{tpu_custom_call.1} parent=1 // pred_check
      _
    $region23: #{tpu_custom_call.1} parent=1 // pred_check_branch
      %56 = sbr.rel (0) target = $region25
    $region24: #{tpu_custom_call.1} parent=1 // pred_region
      _
    $region25: #{tpu_custom_call.1} parent=1 // pred_fallthru
      _
    // Predicated region
    $region26: #{tpu_custom_call.1} parent=1 // pred_check
      _
    $region27: #{tpu_custom_call.1} parent=1 // pred_check_branch
      %58 = sbr.rel (0) target = $region29
    $region28: #{tpu_custom_call.1} parent=1 // pred_region
      _
    $region29: #{tpu_custom_call.1} parent=1 // pred_fallthru
      _
    // Predicated region
    $region30: #{tpu_custom_call.1} parent=1 // pred_check
      _
    $region31: #{tpu_custom_call.1} parent=1 // pred_check_branch
      %60 = sbr.rel (0) target = $region33
    $region32: #{tpu_custom_call.1} parent=1 // pred_region
      _
    $region33: #{tpu_custom_call.1} parent=1 // pred_fallthru
      _
    // Predicated region
    $region34: #{tpu_custom_call.1} parent=1 // pred_check
      _
    $region35: #{tpu_custom_call.1} parent=1 // pred_check_branch
      %62 = sbr.rel (0) target = $region37
    $region36: #{tpu_custom_call.1} parent=1 // pred_region
      %64 = dma.done [#allocation4], 32
    $region37: #{tpu_custom_call.1} parent=1 // pred_fallthru
      _
    // Predicated region
    $region38: #{tpu_custom_call.1} parent=1 // pred_check
      _
    $region39: #{tpu_custom_call.1} parent=1 // pred_check_branch
      %66 = sbr.rel (0) target = $region41
    $region40: #{tpu_custom_call.1} parent=1 // pred_region
      %68 = dma.done [#allocation7], 32
    $region41: #{tpu_custom_call.1} parent=1 // pred_fallthru
      _
    // Predicated region
    $region42: #{tpu_custom_call.1} parent=1 // pred_check
      _
    $region43: #{tpu_custom_call.1} parent=1 // pred_check_branch
      %70 = sbr.rel (0) target = $region45
    $region44: #{tpu_custom_call.1} parent=1 // pred_region
      %72 = dma.done [#allocation7], 512
    $region45: #{tpu_custom_call.1} parent=1 // pred_fallthru
      _
    %v73 = vld [vmem:[#allocation8] sm:$0xff]
    %v74 = vld [vmem:[#allocation8 + $0x8] sm:$0xff]
    %v75 = vld [vmem:[#allocation8 + $0x10] sm:$0xff]
    %v76 = vld [vmem:[#allocation8 + $0x18] sm:$0xff]
    %v77 = vld [vmem:[%s5] sm:$0x1]
    %v79 = vperm.slane %v77, 0
    %v81 = vld [vmem:[%s0] sm:$0x3]
    %v82 = vld [vmem:[#allocation3] sm:$0x3]
    %84 = vrot.lane.b32.xlu0 %v82, 32
    %v85 = vpop.permute.xlu0 %84
    %vm87 = vcmask 261120
    %v88 = vsel %vm87, %v81, %v85
    %v89 = vld [vmem:[%s3] sm:$0xff]
    %v90 = vld [vmem:[%s3 + $0x8] sm:$0xff]
    %v91 = vld [vmem:[%s3 + $0x10] sm:$0xff]
    %v92 = vld [vmem:[%s3 + $0x18] sm:$0xff]
    %v93 = vld [vmem:[%s3 + $0x20] sm:$0xff]
    %v94 = vld [vmem:[%s3 + $0x28] sm:$0xff]
    %v95 = vld [vmem:[%s3 + $0x30] sm:$0xff]
    %v96 = vld [vmem:[%s3 + $0x38] sm:$0xff]
    %vm97 = vcmask 523264
    %v99 = vsel %vm97, %v88, 0
    %101 = vmatpush.msra.mxu0 0.0
    %102 = vmatpush.msra.mxu0 0.0
    %103 = vmatpush.msra.mxu0 0.0
    %104 = vmatpush.msra.mxu0 0.0
    %105 = vmatpush.msra.mxu0 0.0
    %106 = vmatpush.msra.mxu0 0.0
    %107 = vmatpush.msra.mxu0 0.0
    %108 = vmatpush.msra.mxu0 0.0
    %109 = vmatpush.msra.mxu0 %v96
    %110 = vmatpush.msra.mxu0 %v95
    %111 = vmatpush.msra.mxu0 %v94
    %112 = vmatpush.msra.mxu0 %v93
    %113 = vmatpush.msra.mxu0 %v92
    %114 = vmatpush.msra.mxu0 %v91
    %115 = vmatpush.msra.mxu0 %v90
    %116 = vmatpush.msra.mxu0 %v89
    %117 = vmatmul.f32.gmra.mxu0 %v99
    %v118 = vpop.f32.mrf.mxu0
    %v119 = vadd.f32 %v79, %v118
    %120 = vdwg.mxu0
    %v121 = vld [vmem:[#allocation6] sm:$0x3]
    %v122 = vxor.u32 %v119, 2147483648
    %v123 = vmul.f32 %v122, 1.442695
    %v124 = vpow.pop %v123
    %v125 = vadd.f32 %v124, 1.0
    %v126 = vrcp.pop %v125
    %v127 = vmul.f32 %v125, %v126
    %v128 = vsub.f32 1.0, %v127
    %v129 = vmul.f32 %v126, %v128
    %v130 = vadd.f32 %v126, %v129
    %vm131 = vweird.f32 %v125
    %vm132 = vweird.f32 %v126
    %vm133 = vmor %vm131, %vm132
    %v134 = vsel %vm133, %v126, %v130
    %v135 = vand.u32 2147483647, %v125
    %vm136 = vcmp.eq.f32.partialorder %v135, 8.507059e+37
    %v137 = vand.u32 %v125, 2147483648
    %v138 = vor.u32 1.1754944e-38, %v137
    %v139 = vsel %vm136, %v138, %v134
    %v140 = vmul.f32 1.0, %v139
    %v141 = vtanh.pop %v119
    %143 = vrot.lane.b32.xlu0 %v121, 32
    %v144 = vpop.permute.xlu0 %143
    %v146 = vmul.f32 %v140, %v144
    %148 = vrot.lane.b32.xlu0 %v141, 64
    %v149 = vpop.permute.xlu0 %148
    %v151 = vmul.f32 %v140, %v149
    %153 = vrot.lane.b32.xlu0 %v151, 32
    %v154 = vpop.permute.xlu0 %153
    %v156 = vadd.f32 %v146, %v154
    %v157 = vtanh.pop %v156
    %159 = vrot.lane.b32.xlu0 %v157, 64
    %v160 = vpop.permute.xlu0 %159
    %v162 = vmul.f32 %v140, %v160
    %v164 = vrot.slane %v162, 1
    %v165 = vperm.slane %v162, 0
    %v166 = vperm.slane %v164, 0
    %167 = vrot.lane.b32.xlu0 %v165, 32
    %v168 = vpop.permute.xlu0 %167
    %169 = vrot.lane.b32.xlu0 %v166, 32
    %v170 = vpop.permute.xlu0 %169
    %vm173 = vcmask 253952
    %174 = vst.msk [vmem:[#allocation2] sm:$0x1] %vm173, %v168
    %175 = vst.msk [vmem:[#allocation2 + $0x8] sm:$0x1] %vm173, %v170
    %176 = vrot.lane.b32.xlu0 %v162, 32
    %v177 = vpop.permute.xlu0 %176
    %v178 = vsel %vm87, %v177, 0
    %180 = vmatpush.msra.mxu0 0.0
    %181 = vmatpush.msra.mxu0 0.0
    %182 = vmatpush.msra.mxu0 0.0
    %183 = vmatpush.msra.mxu0 0.0
    %184 = vmatpush.msra.mxu0 0.0
    %185 = vmatpush.msra.mxu0 0.0
    %186 = vmatpush.msra.mxu0 0.0
    %187 = vmatpush.msra.mxu0 0.0
    %188 = vmatpush.msra.mxu0 0.0
    %189 = vmatpush.msra.mxu0 0.0
    %190 = vmatpush.msra.mxu0 0.0
    %191 = vmatpush.msra.mxu0 0.0
    %192 = vmatpush.msra.mxu0 %v76
    %193 = vmatpush.msra.mxu0 %v75
    %194 = vmatpush.msra.mxu0 %v74
    %195 = vmatpush.msra.mxu0 %v73
    %196 = vmatmul.f32.gmra.mxu0 %v178
    %v197 = vpop.f32.mrf.mxu0
    %v198 = vadd.f32 %v79, %v197
    %199 = vdwg.mxu0
    %v200 = vxor.u32 %v198, 2147483648
    %v201 = vmul.f32 %v200, 1.442695
    %v202 = vpow.pop %v201
    %v203 = vadd.f32 %v202, 1.0
    %v204 = vrcp.pop %v203
    %v205 = vmul.f32 %v203, %v204
    %v206 = vsub.f32 1.0, %v205
    %v207 = vmul.f32 %v204, %v206
    %v208 = vadd.f32 %v204, %v207
    %vm209 = vweird.f32 %v203
    %vm210 = vweird.f32 %v204
    %vm211 = vmor %vm209, %vm210
    %v212 = vsel %vm211, %v204, %v208
    %v213 = vand.u32 2147483647, %v203
    %vm214 = vcmp.eq.f32.partialorder %v213, 8.507059e+37
    %v215 = vand.u32 %v203, 2147483648
    %v216 = vor.u32 1.1754944e-38, %v215
    %v217 = vsel %vm214, %v216, %v212
    %v218 = vmul.f32 1.0, %v217
    %v219 = vtanh.pop %v198
    %v220 = vmul.f32 %v218, %v156
    %222 = vrot.lane.b32.xlu0 %v219, 64
    %v223 = vpop.permute.xlu0 %222
    %v225 = vmul.f32 %v218, %v223
    %227 = vrot.lane.b32.xlu0 %v225, 32
    %v228 = vpop.permute.xlu0 %227
    %v230 = vadd.f32 %v220, %v228
    %v231 = vtanh.pop %v230
    %233 = vrot.lane.b32.xlu0 %v231, 64
    %v234 = vpop.permute.xlu0 %233
    %v236 = vmul.f32 %v218, %v234
    %v238 = vrot.slane %v236, 1
    %v239 = vperm.slane %v236, 0
    %v240 = vperm.slane %v238, 0
    %241 = vrot.lane.b32.xlu0 %v239, 32
    %v242 = vpop.permute.xlu0 %241
    %243 = vrot.lane.b32.xlu0 %v240, 32
    %v244 = vpop.permute.xlu0 %243
    %247 = vst.msk [vmem:[#allocation2 + $0x1] sm:$0x1] %vm173, %v242
    %248 = vst.msk [vmem:[#allocation2 + $0x9] sm:$0x1] %vm173, %v244
    %249 = vrot.lane.b32.xlu0 %v236, 32
    %v250 = vpop.permute.xlu0 %249
    %v251 = vsel %vm87, %v250, 0
    %253 = vmatpush.msra.mxu0 0.0
    %254 = vmatpush.msra.mxu0 0.0
    %255 = vmatpush.msra.mxu0 0.0
    %256 = vmatpush.msra.mxu0 0.0
    %257 = vmatpush.msra.mxu0 0.0
    %258 = vmatpush.msra.mxu0 0.0
    %259 = vmatpush.msra.mxu0 0.0
    %260 = vmatpush.msra.mxu0 0.0
    %261 = vmatpush.msra.mxu0 0.0
    %262 = vmatpush.msra.mxu0 0.0
    %263 = vmatpush.msra.mxu0 0.0
    %264 = vmatpush.msra.mxu0 0.0
    %265 = vmatpush.msra.mxu0 %v76
    %266 = vmatpush.msra.mxu0 %v75
    %267 = vmatpush.msra.mxu0 %v74
    %268 = vmatpush.msra.mxu0 %v73
    %269 = vmatmul.f32.gmra.mxu0 %v251
    %v270 = vpop.f32.mrf.mxu0
    %v271 = vadd.f32 %v79, %v270
    %272 = vdwg.mxu0
    %v273 = vxor.u32 %v271, 2147483648
    %v274 = vmul.f32 %v273, 1.442695
    %v275 = vpow.pop %v274
    %v276 = vadd.f32 %v275, 1.0
    %v277 = vrcp.pop %v276
    %v278 = vmul.f32 %v276, %v277
    %v279 = vsub.f32 1.0, %v278
    %v280 = vmul.f32 %v277, %v279
    %v281 = vadd.f32 %v277, %v280
    %vm282 = vweird.f32 %v276
    %vm283 = vweird.f32 %v277
    %vm284 = vmor %vm282, %vm283
    %v285 = vsel %vm284, %v277, %v281
    %v286 = vand.u32 2147483647, %v276
    %vm287 = vcmp.eq.f32.partialorder %v286, 8.507059e+37
    %v288 = vand.u32 %v276, 2147483648
    %v289 = vor.u32 1.1754944e-38, %v288
    %v290 = vsel %vm287, %v289, %v285
    %v291 = vmul.f32 1.0, %v290
    %v292 = vtanh.pop %v271
    %v293 = vmul.f32 %v291, %v230
    %295 = vrot.lane.b32.xlu0 %v292, 64
    %v296 = vpop.permute.xlu0 %295
    %v298 = vmul.f32 %v291, %v296
    %300 = vrot.lane.b32.xlu0 %v298, 32
    %v301 = vpop.permute.xlu0 %300
    %v303 = vadd.f32 %v293, %v301
    %v304 = vtanh.pop %v303
    %306 = vrot.lane.b32.xlu0 %v304, 64
    %v307 = vpop.permute.xlu0 %306
    %v309 = vmul.f32 %v291, %v307
    %v311 = vrot.slane %v309, 1
    %v312 = vperm.slane %v309, 0
    %v313 = vperm.slane %v311, 0
    %314 = vrot.lane.b32.xlu0 %v312, 32
    %v315 = vpop.permute.xlu0 %314
    %316 = vrot.lane.b32.xlu0 %v313, 32
    %v317 = vpop.permute.xlu0 %316
    %320 = vst.msk [vmem:[#allocation2 + $0x2] sm:$0x1] %vm173, %v315
    %321 = vst.msk [vmem:[#allocation2 + $0xa] sm:$0x1] %vm173, %v317
    %322 = vrot.lane.b32.xlu0 %v309, 32
    %v323 = vpop.permute.xlu0 %322
    %v324 = vsel %vm87, %v323, 0
    %326 = vmatpush.msra.mxu0 0.0
    %327 = vmatpush.msra.mxu0 0.0
    %328 = vmatpush.msra.mxu0 0.0
    %329 = vmatpush.msra.mxu0 0.0
    %330 = vmatpush.msra.mxu0 0.0
    %331 = vmatpush.msra.mxu0 0.0
    %332 = vmatpush.msra.mxu0 0.0
    %333 = vmatpush.msra.mxu0 0.0
    %334 = vmatpush.msra.mxu0 0.0
    %335 = vmatpush.msra.mxu0 0.0
    %336 = vmatpush.msra.mxu0 0.0
    %337 = vmatpush.msra.mxu0 0.0
    %338 = vmatpush.msra.mxu0 %v76
    %339 = vmatpush.msra.mxu0 %v75
    %340 = vmatpush.msra.mxu0 %v74
    %341 = vmatpush.msra.mxu0 %v73
    %342 = vmatmul.f32.gmra.mxu0 %v324
    %v343 = vpop.f32.mrf.mxu0
    %v344 = vadd.f32 %v79, %v343
    %345 = vdwg.mxu0
    %v346 = vxor.u32 %v344, 2147483648
    %v347 = vmul.f32 %v346, 1.442695
    %v348 = vpow.pop %v347
    %v349 = vadd.f32 %v348, 1.0
    %v350 = vrcp.pop %v349
    %v351 = vmul.f32 %v349, %v350
    %v352 = vsub.f32 1.0, %v351
    %v353 = vmul.f32 %v350, %v352
    %v354 = vadd.f32 %v350, %v353
    %vm355 = vweird.f32 %v349
    %vm356 = vweird.f32 %v350
    %vm357 = vmor %vm355, %vm356
    %v358 = vsel %vm357, %v350, %v354
    %v359 = vand.u32 2147483647, %v349
    %vm360 = vcmp.eq.f32.partialorder %v359, 8.507059e+37
    %v361 = vand.u32 %v349, 2147483648
    %v362 = vor.u32 1.1754944e-38, %v361
    %v363 = vsel %vm360, %v362, %v358
    %v364 = vmul.f32 1.0, %v363
    %v365 = vtanh.pop %v344
    %v366 = vmul.f32 %v364, %v303
    %368 = vrot.lane.b32.xlu0 %v365, 64
    %v369 = vpop.permute.xlu0 %368
    %v371 = vmul.f32 %v364, %v369
    %373 = vrot.lane.b32.xlu0 %v371, 32
    %v374 = vpop.permute.xlu0 %373
    %v376 = vadd.f32 %v366, %v374
    %v377 = vtanh.pop %v376
    %379 = vrot.lane.b32.xlu0 %v377, 64
    %v380 = vpop.permute.xlu0 %379
    %v382 = vmul.f32 %v364, %v380
    %v384 = vrot.slane %v382, 1
    %v385 = vperm.slane %v382, 0
    %v386 = vperm.slane %v384, 0
    %387 = vrot.lane.b32.xlu0 %v385, 32
    %v388 = vpop.permute.xlu0 %387
    %389 = vrot.lane.b32.xlu0 %v386, 32
    %v390 = vpop.permute.xlu0 %389
    %393 = vst.msk [vmem:[#allocation2 + $0x3] sm:$0x1] %vm173, %v388
    %394 = vst.msk [vmem:[#allocation2 + $0xb] sm:$0x1] %vm173, %v390
    %395 = vrot.lane.b32.xlu0 %v382, 32
    %v396 = vpop.permute.xlu0 %395
    %v397 = vsel %vm87, %v396, 0
    %399 = vmatpush.msra.mxu0 0.0
    %400 = vmatpush.msra.mxu0 0.0
    %401 = vmatpush.msra.mxu0 0.0
    %402 = vmatpush.msra.mxu0 0.0
    %403 = vmatpush.msra.mxu0 0.0
    %404 = vmatpush.msra.mxu0 0.0
    %405 = vmatpush.msra.mxu0 0.0
    %406 = vmatpush.msra.mxu0 0.0
    %407 = vmatpush.msra.mxu0 0.0
    %408 = vmatpush.msra.mxu0 0.0
    %409 = vmatpush.msra.mxu0 0.0
    %410 = vmatpush.msra.mxu0 0.0
    %411 = vmatpush.msra.mxu0 %v76
    %412 = vmatpush.msra.mxu0 %v75
    %413 = vmatpush.msra.mxu0 %v74
    %414 = vmatpush.msra.mxu0 %v73
    %415 = vmatmul.f32.gmra.mxu0 %v397
    %v416 = vpop.f32.mrf.mxu0
    %v417 = vadd.f32 %v79, %v416
    %418 = vdwg.mxu0
    %v419 = vxor.u32 %v417, 2147483648
    %v420 = vmul.f32 %v419, 1.442695
    %v421 = vpow.pop %v420
    %v422 = vadd.f32 %v421, 1.0
    %v423 = vrcp.pop %v422
    %v424 = vmul.f32 %v422, %v423
    %v425 = vsub.f32 1.0, %v424
    %v426 = vmul.f32 %v423, %v425
    %v427 = vadd.f32 %v423, %v426
    %vm428 = vweird.f32 %v422
    %vm429 = vweird.f32 %v423
    %vm430 = vmor %vm428, %vm429
    %v431 = vsel %vm430, %v423, %v427
    %v432 = vand.u32 2147483647, %v422
    %vm433 = vcmp.eq.f32.partialorder %v432, 8.507059e+37
    %v434 = vand.u32 %v422, 2147483648
    %v435 = vor.u32 1.1754944e-38, %v434
    %v436 = vsel %vm433, %v435, %v431
    %v437 = vmul.f32 1.0, %v436
    %v438 = vtanh.pop %v417
    %v439 = vmul.f32 %v437, %v376
    %441 = vrot.lane.b32.xlu0 %v438, 64
    %v442 = vpop.permute.xlu0 %441
    %v444 = vmul.f32 %v437, %v442
    %446 = vrot.lane.b32.xlu0 %v444, 32
    %v447 = vpop.permute.xlu0 %446
    %v449 = vadd.f32 %v439, %v447
    %v450 = vtanh.pop %v449
    %452 = vrot.lane.b32.xlu0 %v450, 64
    %v453 = vpop.permute.xlu0 %452
    %v455 = vmul.f32 %v437, %v453
    %v457 = vrot.slane %v455, 1
    %v458 = vperm.slane %v455, 0
    %v459 = vperm.slane %v457, 0
    %460 = vrot.lane.b32.xlu0 %v458, 32
    %v461 = vpop.permute.xlu0 %460
    %462 = vrot.lane.b32.xlu0 %v459, 32
    %v463 = vpop.permute.xlu0 %462
    %466 = vst.msk [vmem:[#allocation2 + $0x4] sm:$0x1] %vm173, %v461
    %467 = vst.msk [vmem:[#allocation2 + $0xc] sm:$0x1] %vm173, %v463
    %468 = vrot.lane.b32.xlu0 %v455, 32
    %v469 = vpop.permute.xlu0 %468
    %v470 = vsel %vm87, %v469, 0
    %472 = vmatpush.msra.mxu0 0.0
    %473 = vmatpush.msra.mxu0 0.0
    %474 = vmatpush.msra.mxu0 0.0
    %475 = vmatpush.msra.mxu0 0.0
    %476 = vmatpush.msra.mxu0 0.0
    %477 = vmatpush.msra.mxu0 0.0
    %478 = vmatpush.msra.mxu0 0.0
    %479 = vmatpush.msra.mxu0 0.0
    %480 = vmatpush.msra.mxu0 0.0
    %481 = vmatpush.msra.mxu0 0.0
    %482 = vmatpush.msra.mxu0 0.0
    %483 = vmatpush.msra.mxu0 0.0
    %484 = vmatpush.msra.mxu0 %v76
    %485 = vmatpush.msra.mxu0 %v75
    %486 = vmatpush.msra.mxu0 %v74
    %487 = vmatpush.msra.mxu0 %v73
    %488 = vmatmul.f32.gmra.mxu0 %v470
    %v489 = vpop.f32.mrf.mxu0
    %v490 = vadd.f32 %v79, %v489
    %491 = vdwg.mxu0
    %v492 = vxor.u32 %v490, 2147483648
    %v493 = vmul.f32 %v492, 1.442695
    %v494 = vpow.pop %v493
    %v495 = vadd.f32 %v494, 1.0
    %v496 = vrcp.pop %v495
    %v497 = vmul.f32 %v495, %v496
    %v498 = vsub.f32 1.0, %v497
    %v499 = vmul.f32 %v496, %v498
    %v500 = vadd.f32 %v496, %v499
    %vm501 = vweird.f32 %v495
    %vm502 = vweird.f32 %v496
    %vm503 = vmor %vm501, %vm502
    %v504 = vsel %vm503, %v496, %v500
    %v505 = vand.u32 2147483647, %v495
    %vm506 = vcmp.eq.f32.partialorder %v505, 8.507059e+37
    %v507 = vand.u32 %v495, 2147483648
    %v508 = vor.u32 1.1754944e-38, %v507
    %v509 = vsel %vm506, %v508, %v504
    %v510 = vmul.f32 1.0, %v509
    %v511 = vtanh.pop %v490
    %v512 = vmul.f32 %v510, %v449
    %514 = vrot.lane.b32.xlu0 %v511, 64
    %v515 = vpop.permute.xlu0 %514
    %v517 = vmul.f32 %v510, %v515
    %519 = vrot.lane.b32.xlu0 %v517, 32
    %v520 = vpop.permute.xlu0 %519
    %v522 = vadd.f32 %v512, %v520
    %v523 = vtanh.pop %v522
    %525 = vrot.lane.b32.xlu0 %v523, 64
    %v526 = vpop.permute.xlu0 %525
    %v528 = vmul.f32 %v510, %v526
    %v530 = vrot.slane %v528, 1
    %v531 = vperm.slane %v528, 0
    %v532 = vperm.slane %v530, 0
    %533 = vrot.lane.b32.xlu0 %v531, 32
    %v534 = vpop.permute.xlu0 %533
    %535 = vrot.lane.b32.xlu0 %v532, 32
    %v536 = vpop.permute.xlu0 %535
    %539 = vst.msk [vmem:[#allocation2 + $0x5] sm:$0x1] %vm173, %v534
    %540 = vst.msk [vmem:[#allocation2 + $0xd] sm:$0x1] %vm173, %v536
    %541 = vrot.lane.b32.xlu0 %v528, 32
    %v542 = vpop.permute.xlu0 %541
    %v543 = vsel %vm87, %v542, 0
    %545 = vmatpush.msra.mxu0 0.0
    %546 = vmatpush.msra.mxu0 0.0
    %547 = vmatpush.msra.mxu0 0.0
    %548 = vmatpush.msra.mxu0 0.0
    %549 = vmatpush.msra.mxu0 0.0
    %550 = vmatpush.msra.mxu0 0.0
    %551 = vmatpush.msra.mxu0 0.0
    %552 = vmatpush.msra.mxu0 0.0
    %553 = vmatpush.msra.mxu0 0.0
    %554 = vmatpush.msra.mxu0 0.0
    %555 = vmatpush.msra.mxu0 0.0
    %556 = vmatpush.msra.mxu0 0.0
    %557 = vmatpush.msra.mxu0 %v76
    %558 = vmatpush.msra.mxu0 %v75
    %559 = vmatpush.msra.mxu0 %v74
    %560 = vmatpush.msra.mxu0 %v73
    %561 = vmatmul.f32.gmra.mxu0 %v543
    %v562 = vpop.f32.mrf.mxu0
    %v563 = vadd.f32 %v79, %v562
    %564 = vdwg.mxu0
    %v565 = vxor.u32 %v563, 2147483648
    %v566 = vmul.f32 %v565, 1.442695
    %v567 = vpow.pop %v566
    %v568 = vadd.f32 %v567, 1.0
    %v569 = vrcp.pop %v568
    %v570 = vmul.f32 %v568, %v569
    %v571 = vsub.f32 1.0, %v570
    %v572 = vmul.f32 %v569, %v571
    %v573 = vadd.f32 %v569, %v572
    %vm574 = vweird.f32 %v568
    %vm575 = vweird.f32 %v569
    %vm576 = vmor %vm574, %vm575
    %v577 = vsel %vm576, %v569, %v573
    %v578 = vand.u32 2147483647, %v568
    %vm579 = vcmp.eq.f32.partialorder %v578, 8.507059e+37
    %v580 = vand.u32 %v568, 2147483648
    %v581 = vor.u32 1.1754944e-38, %v580
    %v582 = vsel %vm579, %v581, %v577
    %v583 = vmul.f32 1.0, %v582
    %v584 = vtanh.pop %v563
    %v585 = vmul.f32 %v583, %v522
    %587 = vrot.lane.b32.xlu0 %v584, 64
    %v588 = vpop.permute.xlu0 %587
    %v590 = vmul.f32 %v583, %v588
    %592 = vrot.lane.b32.xlu0 %v590, 32
    %v593 = vpop.permute.xlu0 %592
    %v595 = vadd.f32 %v585, %v593
    %v596 = vtanh.pop %v595
    %598 = vrot.lane.b32.xlu0 %v596, 64
    %v599 = vpop.permute.xlu0 %598
    %v601 = vmul.f32 %v583, %v599
    %v603 = vrot.slane %v601, 1
    %v604 = vperm.slane %v601, 0
    %v605 = vperm.slane %v603, 0
    %606 = vrot.lane.b32.xlu0 %v604, 32
    %v607 = vpop.permute.xlu0 %606
    %608 = vrot.lane.b32.xlu0 %v605, 32
    %v609 = vpop.permute.xlu0 %608
    %612 = vst.msk [vmem:[#allocation2 + $0x6] sm:$0x1] %vm173, %v607
    %613 = vst.msk [vmem:[#allocation2 + $0xe] sm:$0x1] %vm173, %v609
    %614 = vrot.lane.b32.xlu0 %v601, 32
    %v615 = vpop.permute.xlu0 %614
    %v616 = vsel %vm87, %v615, 0
    %618 = vmatpush.msra.mxu0 0.0
    %619 = vmatpush.msra.mxu0 0.0
    %620 = vmatpush.msra.mxu0 0.0
    %621 = vmatpush.msra.mxu0 0.0
    %622 = vmatpush.msra.mxu0 0.0
    %623 = vmatpush.msra.mxu0 0.0
    %624 = vmatpush.msra.mxu0 0.0
    %625 = vmatpush.msra.mxu0 0.0
    %626 = vmatpush.msra.mxu0 0.0
    %627 = vmatpush.msra.mxu0 0.0
    %628 = vmatpush.msra.mxu0 0.0
    %629 = vmatpush.msra.mxu0 0.0
    %630 = vmatpush.msra.mxu0 %v76
    %631 = vmatpush.msra.mxu0 %v75
    %632 = vmatpush.msra.mxu0 %v74
    %633 = vmatpush.msra.mxu0 %v73
    %634 = vmatmul.f32.gmra.mxu0 %v616
    %v635 = vpop.f32.mrf.mxu0
    %v636 = vadd.f32 %v79, %v635
    %637 = vdwg.mxu0
    %v638 = vxor.u32 %v636, 2147483648
    %v639 = vmul.f32 %v638, 1.442695
    %v640 = vpow.pop %v639
    %v641 = vadd.f32 %v640, 1.0
    %v642 = vrcp.pop %v641
    %v643 = vmul.f32 %v641, %v642
    %v644 = vsub.f32 1.0, %v643
    %v645 = vmul.f32 %v642, %v644
    %v646 = vadd.f32 %v642, %v645
    %vm647 = vweird.f32 %v641
    %vm648 = vweird.f32 %v642
    %vm649 = vmor %vm647, %vm648
    %v650 = vsel %vm649, %v642, %v646
    %v651 = vand.u32 2147483647, %v641
    %vm652 = vcmp.eq.f32.partialorder %v651, 8.507059e+37
    %v653 = vand.u32 %v641, 2147483648
    %v654 = vor.u32 1.1754944e-38, %v653
    %v655 = vsel %vm652, %v654, %v650
    %v656 = vmul.f32 1.0, %v655
    %v657 = vtanh.pop %v636
    %v658 = vmul.f32 %v656, %v595
    %660 = vrot.lane.b32.xlu0 %v657, 64
    %v661 = vpop.permute.xlu0 %660
    %v663 = vmul.f32 %v656, %v661
    %665 = vrot.lane.b32.xlu0 %v663, 32
    %v666 = vpop.permute.xlu0 %665
    %v668 = vadd.f32 %v658, %v666
    %v669 = vtanh.pop %v668
    %671 = vrot.lane.b32.xlu0 %v669, 64
    %v672 = vpop.permute.xlu0 %671
    %v674 = vmul.f32 %v656, %v672
    %v676 = vrot.slane %v674, 1
    %v677 = vperm.slane %v674, 0
    %v678 = vperm.slane %v676, 0
    %679 = vrot.lane.b32.xlu0 %v677, 32
    %v680 = vpop.permute.xlu0 %679
    %681 = vrot.lane.b32.xlu0 %v678, 32
    %v682 = vpop.permute.xlu0 %681
    %685 = vst.msk [vmem:[#allocation2 + $0x7] sm:$0x1] %vm173, %v680
    %686 = vst.msk [vmem:[#allocation2 + $0xf] sm:$0x1] %vm173, %v682
    %v687 = vld [vmem:[#allocation2] sm:$0xff]
    %v688 = vld [vmem:[#allocation2 + $0x8] sm:$0xff]
    %v689 = vld [vmem:[%s6] sm:$0xff]
    %v690 = vld [vmem:[%s6 + $0x8] sm:$0xff]
    %v691 = vld [vmem:[%s7] sm:$0xff]
    %v692 = vld [vmem:[%s7 + $0x8] sm:$0xff]
    %v693 = vld [vmem:[%s7 + $0x10] sm:$0xff]
    %v694 = vld [vmem:[%s7 + $0x18] sm:$0xff]
    %v695 = vld [vmem:[%s7 + $0x20] sm:$0xff]
    %v696 = vld [vmem:[%s7 + $0x28] sm:$0xff]
    %v697 = vld [vmem:[%s7 + $0x30] sm:$0xff]
    %v698 = vld [vmem:[%s7 + $0x38] sm:$0xff]
    %v700 = vsel %vm87, %v687, 0
    %702 = vmatpush.msra.mxu0 0.0
    %703 = vmatpush.msra.mxu0 0.0
    %704 = vmatpush.msra.mxu0 0.0
    %705 = vmatpush.msra.mxu0 0.0
    %706 = vmatpush.msra.mxu0 0.0
    %707 = vmatpush.msra.mxu0 0.0
    %708 = vmatpush.msra.mxu0 0.0
    %709 = vmatpush.msra.mxu0 0.0
    %710 = vmatpush.msra.mxu0 0.0
    %711 = vmatpush.msra.mxu0 0.0
    %712 = vmatpush.msra.mxu0 0.0
    %713 = vmatpush.msra.mxu0 0.0
    %714 = vmatpush.msra.mxu0 %v694
    %715 = vmatpush.msra.mxu0 %v693
    %716 = vmatpush.msra.mxu0 %v692
    %717 = vmatpush.msra.mxu0 %v691
    %718 = vmatmul.f32.gmra.mxu0 %v700
    %v719 = vpop.f32.mrf.mxu0
    %v720 = vadd.f32 0.0, %v719
    %721 = vdwg.mxu0
    %v723 = vsel %vm87, %v688, 0
    %725 = vmatpush.msra.mxu0 0.0
    %726 = vmatpush.msra.mxu0 0.0
    %727 = vmatpush.msra.mxu0 0.0
    %728 = vmatpush.msra.mxu0 0.0
    %729 = vmatpush.msra.mxu0 0.0
    %730 = vmatpush.msra.mxu0 0.0
    %731 = vmatpush.msra.mxu0 0.0
    %732 = vmatpush.msra.mxu0 0.0
    %733 = vmatpush.msra.mxu0 0.0
    %734 = vmatpush.msra.mxu0 0.0
    %735 = vmatpush.msra.mxu0 0.0
    %736 = vmatpush.msra.mxu0 0.0
    %737 = vmatpush.msra.mxu0 %v698
    %738 = vmatpush.msra.mxu0 %v697
    %739 = vmatpush.msra.mxu0 %v696
    %740 = vmatpush.msra.mxu0 %v695
    %741 = vmatmul.f32.gmra.mxu0 %v723
    %v742 = vpop.f32.mrf.mxu0
    %v743 = vadd.f32 0.0, %v742
    %744 = vdwg.mxu0
    %vm745 = vcmask 64512
    %v746 = vsel %vm745, %v720, -inf
    %747 = vmax.xlane.f32.xlu0 %v746
    %v748 = vpop.xlane.xlu0 %747
    %v749 = vsel %vm745, %v743, -inf
    %750 = vmax.xlane.f32.xlu0 %v749
    %v751 = vpop.xlane.xlu0 %750
    %v752 = vsub.f32 %v720, %v748
    %v753 = vsub.f32 %v743, %v751
    %v754 = vmul.f32 %v752, 1.442695
    %v755 = vpow.pop %v754
    %v756 = vmul.f32 %v753, 1.442695
    %v757 = vpow.pop %v756
    %v758 = vsel %vm745, %v755, 0.0
    %759 = vadd.xlane.f32.xlu0 %v758
    %v760 = vpop.xlane.xlu0 %759
    %v761 = vsel %vm745, %v757, 0.0
    %762 = vadd.xlane.f32.xlu0 %v761
    %v763 = vpop.xlane.xlu0 %762
    %v764 = vrcp.pop %v760
    %v765 = vrcp.pop %v763
    %v766 = vmul.f32 %v760, %v764
    %v767 = vmul.f32 %v763, %v765
    %v768 = vsub.f32 2.0, %v766
    %v769 = vsub.f32 2.0, %v767
    %v770 = vmul.f32 %v764, %v768
    %v771 = vmul.f32 %v765, %v769
    %v772 = vmul.f32 %v755, %v770
    %v773 = vmul.f32 %v757, %v771
    %v775 = vsel %vm745, %v772, 0
    %777 = vmatpush.msra.mxu0 0.0
    %778 = vmatpush.msra.mxu0 0.0
    %779 = vmatpush.msra.mxu0 0.0
    %780 = vmatpush.msra.mxu0 0.0
    %781 = vmatpush.msra.mxu0 0.0
    %782 = vmatpush.msra.mxu0 0.0
    %783 = vmatpush.msra.mxu0 0.0
    %784 = vmatpush.msra.mxu0 0.0
    %785 = vmatpush.msra.mxu0 0.0
    %786 = vmatpush.msra.mxu0 0.0
    %787 = vmatpush.msra.mxu0 0.0
    %788 = vmatpush.msra.mxu0 0.0
    %789 = vmatpush.msra.mxu0 0.0
    %790 = vmatpush.msra.mxu0 0.0
    %791 = vmatpush.msra.mxu0 0.0
    %792 = vmatpush.msra.mxu0 %v689
    %793 = vmatmul.f32.gmra.mxu0 %v775
    %v794 = vpop.f32.mrf.mxu0
    %v795 = vadd.f32 0.0, %v794
    %796 = vdwg.mxu0
    %v798 = vsel %vm745, %v773, 0
    %800 = vmatpush.msra.mxu0 0.0
    %801 = vmatpush.msra.mxu0 0.0
    %802 = vmatpush.msra.mxu0 0.0
    %803 = vmatpush.msra.mxu0 0.0
    %804 = vmatpush.msra.mxu0 0.0
    %805 = vmatpush.msra.mxu0 0.0
    %806 = vmatpush.msra.mxu0 0.0
    %807 = vmatpush.msra.mxu0 0.0
    %808 = vmatpush.msra.mxu0 0.0
    %809 = vmatpush.msra.mxu0 0.0
    %810 = vmatpush.msra.mxu0 0.0
    %811 = vmatpush.msra.mxu0 0.0
    %812 = vmatpush.msra.mxu0 0.0
    %813 = vmatpush.msra.mxu0 0.0
    %814 = vmatpush.msra.mxu0 0.0
    %815 = vmatpush.msra.mxu0 %v690
    %816 = vmatmul.f32.gmra.mxu0 %v798
    %v817 = vpop.f32.mrf.mxu0
    %v818 = vadd.f32 0.0, %v817
    %819 = vdwg.mxu0
    %822 = vrot.lane.b32.xlu0 %v795, 32
    %v823 = vpop.permute.xlu0 %822
    %824 = vrot.lane.b32.xlu0 %v818, 32
    %v825 = vpop.permute.xlu0 %824
    %v828 = vsel %vm87, %v687, %v823
    %v829 = vsel %vm87, %v688, %v825
    %830 = vst.msk [vmem:[#allocation9] sm:$0xff] %vm97, %v828
    %831 = vst.msk [vmem:[#allocation9 + $0x8] sm:$0xff] %vm97, %v829
    // Predicated region
    $region46: #{tpu_custom_call.1} parent=1 // pred_check
      _
    $region47: #{tpu_custom_call.1} parent=1 // pred_check_branch
      %833 = sbr.rel (0) target = $region49
    $region48: #{tpu_custom_call.1} parent=1 // pred_region
      %835 = vsyncadd [#allocation5], 0
      %s836 = sshll.u32 [#allocation9], 4
      %s837 = int_to_ptr.vmem [resolvable:$true] %s836
      %s838 = sshll.u32 %s8, 4
      %s839 = int_to_ptr.hbm [resolvable:$true] %s838
      %844 = dma.vmem_to_hbm [thread:$0]  %s837, 256, %s839, [#allocation5], 128, 128, 8
    $region49: #{tpu_custom_call.1} parent=1 // pred_fallthru
      _
    // Predicated region
    $region50: #{tpu_custom_call.1} parent=1 // pred_check
      _
    $region51: #{tpu_custom_call.1} parent=1 // pred_check_branch
      %846 = sbr.rel (0) target = $region53
    $region52: #{tpu_custom_call.1} parent=1 // pred_region
      %848 = dma.done [#allocation5], 256
    $region53: #{tpu_custom_call.1} parent=1 // pred_fallthru
      _
    %849 = vsyncpa [#allocation4], 1
    %850 = vsyncpa [#allocation7], 1
    %851 = vsyncpa [#allocation5], 1

</llo_original>
